<compile_context>
chip_gen: v7x
topology: tpu7x:2x2x1
jax: 0.10.0
libtpu: 0.0.40
codegen_flags: <defaults>
</compile_context>

<pallas_src>
import functools

import jax
import jax.numpy as jnp
from jax.experimental import pallas as pl
from jax.experimental.pallas import tpu as pltpu


def _round_up(x, m):
    return ((x + m - 1) // m) * m


def _tcn_block_kernel(xcol_ref, wA_ref, bA_ref, w32_ref, wP_ref, b2_ref, o_ref,
                      *, T, Tp, Cp):
    f32 = jnp.float32
    R = xcol_ref.shape[0]                       # Nb * Tp flattened rows
    wdt = wA_ref.dtype

    # ---- branch 1 (conv5) and branch 2a (conv3_1) fused into ONE MXU matmul --
    yA = jnp.dot(xcol_ref[...], wA_ref[...], preferred_element_type=f32)
    yA = jnp.maximum(yA + bA_ref[...], 0.0)     # (R, 2*Cp)
    br1 = yA[:, :Cp]                            # ReLU(conv5(x))
    h = yA[:, Cp:]                              # ReLU(conv3_1(x))

    # Zero the per-element time-padding rows of h so the rolled copies below
    # realize conv3_2's zero padding exactly (incl. block wraparound rows).
    t = jax.lax.broadcasted_iota(jnp.int32, (R, 1), 0) % Tp
    h = jnp.where(t < T, h, 0.0)

    # ---- branch 2b: conv3 (pad=1) over h via sublane rolls (XLU slot) --------
    hm1 = pltpu.roll(h, shift=1, axis=0)        # row r holds h[r-1]
    hp1 = pltpu.roll(h, shift=R - 1, axis=0)    # row r holds h[r+1]
    y2 = (jnp.dot(hm1.astype(wdt), w32_ref[0], preferred_element_type=f32)
          + jnp.dot(h.astype(wdt), w32_ref[1], preferred_element_type=f32)
          + jnp.dot(hp1.astype(wdt), w32_ref[2], preferred_element_type=f32)
          + b2_ref[0:1, :])
    br2 = jnp.maximum(y2, 0.0)                  # ReLU(conv3_2(h))

    # ---- 1x1 conv over channel-concat([br1, br2]) with BatchNorm folded in ---
    y = (jnp.dot(br1.astype(wdt), wP_ref[:Cp, :], preferred_element_type=f32)
         + jnp.dot(br2.astype(wdt), wP_ref[Cp:2 * Cp, :], preferred_element_type=f32)
         + b2_ref[1:2, :])
    o_ref[...] = jnp.maximum(y, 0.0)            # lane-dense (R, Cp) store


def _pick_nb(N, Tp, K1p, Cp, itemsize):
    """Largest divisor of N whose flattened block stays well under VMEM limits."""
    per_row = itemsize * (3 * K1p + 12 * Cp)    # rough live bytes per flattened row
    budget = 8 * 1024 * 1024                    # stay far below v7x's 64 MiB VMEM
    cap = max(1, budget // (Tp * per_row))
    nb = 1
    for d in range(1, N + 1):
        if N % d == 0 and d <= cap:
            nb = d
    return nb


def tcn_block_forward(x_nct, params, eps=1e-5, compute_dtype=jnp.float32):
    """x_nct: (N, Cin, T) float32 -> (N, Cout, T) float32."""
    f32 = jnp.float32
    N, Cin, T = x_nct.shape
    Cout = params["b5"].shape[0]

    Cp = _round_up(Cout, 128)                   # lane-dense channel padding
    Tp = _round_up(T + 1, 8)                    # per-element rows (>= T+1, mult. of 8)
    K1 = 5 * Cin
    K1p = _round_up(K1, 128)                    # lane-dense im2col width
    Nb = _pick_nb(N, Tp, K1p, Cp, 4)
    Rb = Nb * Tp

    # ---- input: NCT -> NTC, zero-pad, im2col for the fused 5-tap conv --------
    x_ntc = jnp.transpose(x_nct, (0, 2, 1)).astype(f32)           # (N, T, Cin)
    xp5 = jnp.pad(x_ntc, ((0, 0), (2, 2), (0, 0)))                # (N, T+4, Cin)
    xcol = jnp.concatenate([xp5[:, k:k + T, :] for k in range(5)], axis=-1)
    xcol = jnp.pad(xcol, ((0, 0), (0, Tp - T), (0, K1p - K1)))    # (N, Tp, K1p)
    xcol2d = xcol.reshape(N * Tp, K1p).astype(compute_dtype)

    # ---- weights: fold taps / branches / BatchNorm in the wrapper ------------
    w5_t = jnp.transpose(params["w5"], (2, 1, 0)).reshape(5 * Cin, Cout)
    w31_t = jnp.transpose(params["w31"], (2, 1, 0)).reshape(3 * Cin, Cout)
    wA = jnp.zeros((K1p, 2 * Cp), f32)
    wA = wA.at[:5 * Cin, :Cout].set(w5_t)                 # conv5 -> lanes [0, Cout)
    wA = wA.at[Cin:4 * Cin, Cp:Cp + Cout].set(w31_t)      # conv3_1 (taps 1..3) -> [Cp, Cp+Cout)

    bA = jnp.zeros((1, 2 * Cp), f32)
    bA = bA.at[0, :Cout].set(params["b5"])
    bA = bA.at[0, Cp:Cp + Cout].set(params["b31"])

    w32 = jnp.zeros((3, Cp, Cp), f32)
    w32 = w32.at[:, :Cout, :Cout].set(jnp.transpose(params["w32"], (2, 1, 0)))

    scale = params["gamma"] / jnp.sqrt(params["var"] + eps)        # BN (eval) fold
    shift = params["beta"] - params["mean"] * scale
    wp2d = jnp.transpose(params["wp"][:, :, 0], (1, 0)) * scale[None, :]  # (2*Cout, Cout)
    wP = jnp.zeros((2 * Cp, Cp), f32)
    wP = wP.at[:Cout, :Cout].set(wp2d[:Cout])
    wP = wP.at[Cp:Cp + Cout, :Cout].set(wp2d[Cout:])

    b2 = jnp.zeros((2, Cp), f32)
    b2 = b2.at[0, :Cout].set(params["b32"])
    b2 = b2.at[1, :Cout].set(params["bp"] * scale + shift)

    wA = wA.astype(compute_dtype)
    w32 = w32.astype(compute_dtype)
    wP = wP.astype(compute_dtype)

    # ---- pallas_call: one block of Nb batch elements per grid step -----------
    kernel = functools.partial(_tcn_block_kernel, T=T, Tp=Tp, Cp=Cp)
    const = lambda nd: (lambda i: (0,) * nd)
    out2d = pl.pallas_call(
        kernel,
        out_shape=jax.ShapeDtypeStruct((N * Tp, Cp), f32),
        grid=(N // Nb,),
        in_specs=[
            pl.BlockSpec((Rb, K1p), lambda i: (i, 0)),            # im2col activations
            pl.BlockSpec((K1p, 2 * Cp), const(2)),                # fused conv5|conv3_1 weight
            pl.BlockSpec((1, 2 * Cp), const(2)),                  # fused conv5|conv3_1 bias
            pl.BlockSpec((3, Cp, Cp), const(3)),                  # conv3_2 weight
            pl.BlockSpec((2 * Cp, Cp), const(2)),                 # 1x1 conv (BN folded)
            pl.BlockSpec((2, Cp), const(2)),                      # [b32 ; bp*scale+shift]
        ],
        out_specs=pl.BlockSpec((Rb, Cp), lambda i: (i, 0)),       # lane-dense output slab
        compiler_params=pltpu.CompilerParams(
            dimension_semantics=("parallel",),                    # batch axis -> 2 TCs on v7x
            vmem_limit_bytes=32 * 1024 * 1024,
        ),
    )(xcol2d, wA, bA, w32, wP, b2)

    out_ntc = out2d.reshape(N, Tp, Cp)[:, :T, :Cout]              # strip time/lane padding
    return jnp.transpose(out_ntc, (0, 2, 1))                      # (N, Cout, T)


# ------------------------- reference (plain JAX, NCT) -------------------------
def _ref_forward(x, p, eps=1e-5):
    def conv1d(x, w, b, pad):
        y = jax.lax.conv_general_dilated(
            x, w, window_strides=(1,), padding=[(pad, pad)],
            dimension_numbers=("NCH", "OIH", "NCH"))
        return y + b[None, :, None]

    b1 = jax.nn.relu(conv1d(x, p["w5"], p["b5"], 2))
    h = jax.nn.relu(conv1d(x, p["w31"], p["b31"], 1))
    b2 = jax.nn.relu(conv1d(h, p["w32"], p["b32"], 1))
    cat = jnp.concatenate([b1, b2], axis=1)
    y = conv1d(cat, p["wp"], p["bp"], 0)
    scale = p["gamma"] / jnp.sqrt(p["var"] + eps)
    shift = p["beta"] - p["mean"] * scale
    y = y * scale[None, :, None] + shift[None, :, None]
    return jax.nn.relu(y)


def _init_params(key, Cin, Cout):
    ks = jax.random.split(key, 12)
    u = lambda k, s, a=0.3: jax.random.uniform(k, s, jnp.float32, -a, a)
    return dict(
        w5=u(ks[0], (Cout, Cin, 5)),  b5=u(ks[1], (Cout,)),
        w31=u(ks[2], (Cout, Cin, 3)), b31=u(ks[3], (Cout,)),
        w32=u(ks[4], (Cout, Cout, 3)), b32=u(ks[5], (Cout,)),
        wp=u(ks[6], (Cout, 2 * Cout, 1)), bp=u(ks[7], (Cout,)),
        gamma=jax.random.uniform(ks[8], (Cout,), jnp.float32, 0.5, 1.5),
        beta=u(ks[9], (Cout,)),
        mean=u(ks[10], (Cout,)),
        var=jax.random.uniform(ks[11], (Cout,), jnp.float32, 0.5, 1.5),
    )


if __name__ == "__main__":
    N, Cin, Cout, T = 2, 4, 8, 16
    key = jax.random.PRNGKey(0)
    kx, kp = jax.random.split(key)
    x = jax.random.normal(kx, (N, Cin, T), jnp.float32)
    params = _init_params(kp, Cin, Cout)

    fwd = jax.jit(tcn_block_forward)
    out = jax.block_until_ready(fwd(x, params))
    ref = jax.block_until_ready(_ref_forward(x, params))

    assert out.shape == (N, Cout, T), out.shape
    err = float(jnp.max(jnp.abs(out - ref)))
    assert jnp.allclose(out, ref, rtol=1e-5, atol=1e-5), err
    print("KERNEL_OK")
</pallas_src>

<mosaic_0001>
module attributes {stable_mosaic.version = 11 : i64} {
  func.func @_tcn_block_kernel(%arg0: i32, %arg1: memref<48x128xf32, #tpu.memory_space<vmem>>, %arg2: memref<128x256xf32, #tpu.memory_space<vmem>>, %arg3: memref<1x256xf32, #tpu.memory_space<vmem>>, %arg4: memref<3x128x128xf32, #tpu.memory_space<vmem>>, %arg5: memref<256x128xf32, #tpu.memory_space<vmem>>, %arg6: memref<2x128xf32, #tpu.memory_space<vmem>>, %arg7: memref<48x128xf32, #tpu.memory_space<vmem>>) attributes {dimension_semantics = [#tpu.dimension_semantics<parallel>], iteration_bounds = array<i64: 1>, scalar_prefetch = 0 : i64, scratch_operands = 0 : i64, tpu.core_type = #tpu.core_type<tc>, window_params = [{transform_indices = @transform_0, window_bounds = array<i64: 48, 128>}, {pipeline_mode = #tpu.pipeline_mode<synchronous>, transform_indices = @transform_1, window_bounds = array<i64: 128, 256>}, {pipeline_mode = #tpu.pipeline_mode<synchronous>, transform_indices = @transform_2, window_bounds = array<i64: 1, 256>}, {pipeline_mode = #tpu.pipeline_mode<synchronous>, transform_indices = @transform_3, window_bounds = array<i64: 3, 128, 128>}, {pipeline_mode = #tpu.pipeline_mode<synchronous>, transform_indices = @transform_4, window_bounds = array<i64: 256, 128>}, {pipeline_mode = #tpu.pipeline_mode<synchronous>, transform_indices = @transform_5, window_bounds = array<i64: 2, 128>}, {transform_indices = @transform_6, window_bounds = array<i64: 48, 128>}]} {
    %c0 = arith.constant 0 : index
    %c0_0 = arith.constant 0 : index
    %0 = vector.load %arg1[%c0, %c0_0] : memref<48x128xf32, #tpu.memory_space<vmem>>, vector<48x128xf32>
    %c0_1 = arith.constant 0 : index
    %c0_2 = arith.constant 0 : index
    %1 = vector.load %arg2[%c0_1, %c0_2] : memref<128x256xf32, #tpu.memory_space<vmem>>, vector<128x256xf32>
    %cst = arith.constant dense<0.000000e+00> : vector<48x256xf32>
    %2 = tpu.matmul %0, %1, %cst {dimension_numbers = #tpu.dot_dimension_numbers<[1], [0], [0], [1], [0, 0, 1, 1], [], []>} : vector<48x128xf32>, vector<128x256xf32>, vector<48x256xf32> -> vector<48x256xf32>
    %c0_3 = arith.constant 0 : index
    %c0_4 = arith.constant 0 : index
    %3 = vector.load %arg3[%c0_3, %c0_4] : memref<1x256xf32, #tpu.memory_space<vmem>>, vector<1x256xf32>
    %4 = vector.broadcast %3 : vector<1x256xf32> to vector<48x256xf32>
    %5 = arith.addf %2, %4 : vector<48x256xf32>
    %cst_5 = arith.constant 0.000000e+00 : f32
    %6 = vector.broadcast %cst_5 : f32 to vector<48x256xf32>
    %7 = arith.maximumf %5, %6 : vector<48x256xf32>
    %8 = vector.extract_strided_slice %7 {offsets = [0, 0], sizes = [48, 128], strides = [1, 1]} : vector<48x256xf32> to vector<48x128xf32>
    %9 = vector.extract_strided_slice %7 {offsets = [0, 128], sizes = [48, 128], strides = [1, 1]} : vector<48x256xf32> to vector<48x128xf32>
    %10 = tpu.iota {dimensions = array<i32: 0>} : vector<48x1xi32>
    %c24_i32 = arith.constant 24 : i32
    %c0_i32 = arith.constant 0 : i32
    %11 = arith.cmpi eq, %c24_i32, %c0_i32 : i32
    %c1_i32 = arith.constant 1 : i32
    %12 = arith.select %11, %c1_i32, %c24_i32 : i32
    %13 = vector.broadcast %12 : i32 to vector<48x1xi32>
    %14 = arith.remsi %10, %13 : vector<48x1xi32>
    %c0_i32_6 = arith.constant 0 : i32
    %15 = vector.broadcast %c0_i32_6 : i32 to vector<48x1xi32>
    %16 = arith.cmpi ne, %14, %15 : vector<48x1xi32>
    %c0_i32_7 = arith.constant 0 : i32
    %17 = vector.broadcast %c0_i32_7 : i32 to vector<48x1xi32>
    %18 = arith.cmpi slt, %14, %17 : vector<48x1xi32>
    %c0_i32_8 = arith.constant 0 : i32
    %19 = arith.cmpi slt, %12, %c0_i32_8 : i32
    %20 = vector.broadcast %19 : i1 to vector<48x1xi1>
    %21 = vector.broadcast %20 : vector<48x1xi1> to vector<48x1xi1>
    %22 = arith.xori %18, %21 : vector<48x1xi1>
    %23 = arith.andi %22, %16 : vector<48x1xi1>
    %24 = vector.broadcast %12 : i32 to vector<48x1xi32>
    %25 = arith.addi %14, %24 : vector<48x1xi32>
    %26 = arith.select %23, %25, %14 : vector<48x1xi1>, vector<48x1xi32>
    %c16_i32 = arith.constant 16 : i32
    %27 = vector.broadcast %c16_i32 : i32 to vector<48x1xi32>
    %28 = arith.cmpi slt, %26, %27 : vector<48x1xi32>
    %cst_9 = arith.constant 0.000000e+00 : f32
    %29 = vector.shape_cast %28 : vector<48x1xi1> to vector<48x1xi1>
    %30 = vector.broadcast %29 : vector<48x1xi1> to vector<48x128xi1>
    %31 = vector.broadcast %cst_9 : f32 to vector<48x128xf32>
    %32 = arith.select %30, %9, %31 : vector<48x128xi1>, vector<48x128xf32>
    %c1_i32_10 = arith.constant 1 : i32
    %33 = tpu.dynamic_rotate %32 by %c1_i32_10 dim 0 : vector<48x128xf32>, i32 -> vector<48x128xf32>
    %c47_i32 = arith.constant 47 : i32
    %34 = tpu.dynamic_rotate %32 by %c47_i32 dim 0 : vector<48x128xf32>, i32 -> vector<48x128xf32>
    %c0_11 = arith.constant 0 : index
    %c0_12 = arith.constant 0 : index
    %c0_13 = arith.constant 0 : index
    %35 = vector.load %arg4[%c0_11, %c0_12, %c0_13] : memref<3x128x128xf32, #tpu.memory_space<vmem>>, vector<1x128x128xf32>
    %36 = vector.shape_cast %35 : vector<1x128x128xf32> to vector<128x128xf32>
    %cst_14 = arith.constant dense<0.000000e+00> : vector<48x128xf32>
    %37 = tpu.matmul %33, %36, %cst_14 {dimension_numbers = #tpu.dot_dimension_numbers<[1], [0], [0], [1], [0, 0, 1, 1], [], []>} : vector<48x128xf32>, vector<128x128xf32>, vector<48x128xf32> -> vector<48x128xf32>
    %c1 = arith.constant 1 : index
    %c0_15 = arith.constant 0 : index
    %c0_16 = arith.constant 0 : index
    %38 = vector.load %arg4[%c1, %c0_15, %c0_16] : memref<3x128x128xf32, #tpu.memory_space<vmem>>, vector<1x128x128xf32>
    %39 = vector.shape_cast %38 : vector<1x128x128xf32> to vector<128x128xf32>
    %cst_17 = arith.constant dense<0.000000e+00> : vector<48x128xf32>
    %40 = tpu.matmul %32, %39, %cst_17 {dimension_numbers = #tpu.dot_dimension_numbers<[1], [0], [0], [1], [0, 0, 1, 1], [], []>} : vector<48x128xf32>, vector<128x128xf32>, vector<48x128xf32> -> vector<48x128xf32>
    %41 = arith.addf %37, %40 : vector<48x128xf32>
    %c2 = arith.constant 2 : index
    %c0_18 = arith.constant 0 : index
    %c0_19 = arith.constant 0 : index
    %42 = vector.load %arg4[%c2, %c0_18, %c0_19] : memref<3x128x128xf32, #tpu.memory_space<vmem>>, vector<1x128x128xf32>
    %43 = vector.shape_cast %42 : vector<1x128x128xf32> to vector<128x128xf32>
    %cst_20 = arith.constant dense<0.000000e+00> : vector<48x128xf32>
    %44 = tpu.matmul %34, %43, %cst_20 {dimension_numbers = #tpu.dot_dimension_numbers<[1], [0], [0], [1], [0, 0, 1, 1], [], []>} : vector<48x128xf32>, vector<128x128xf32>, vector<48x128xf32> -> vector<48x128xf32>
    %45 = arith.addf %41, %44 : vector<48x128xf32>
    %c0_21 = arith.constant 0 : index
    %c0_22 = arith.constant 0 : index
    %46 = vector.load %arg6[%c0_21, %c0_22] : memref<2x128xf32, #tpu.memory_space<vmem>>, vector<1x128xf32>
    %47 = vector.broadcast %46 : vector<1x128xf32> to vector<48x128xf32>
    %48 = arith.addf %45, %47 : vector<48x128xf32>
    %cst_23 = arith.constant 0.000000e+00 : f32
    %49 = vector.broadcast %cst_23 : f32 to vector<48x128xf32>
    %50 = arith.maximumf %48, %49 : vector<48x128xf32>
    %c0_24 = arith.constant 0 : index
    %c0_25 = arith.constant 0 : index
    %51 = vector.load %arg5[%c0_24, %c0_25] : memref<256x128xf32, #tpu.memory_space<vmem>>, vector<128x128xf32>
    %cst_26 = arith.constant dense<0.000000e+00> : vector<48x128xf32>
    %52 = tpu.matmul %8, %51, %cst_26 {dimension_numbers = #tpu.dot_dimension_numbers<[1], [0], [0], [1], [0, 0, 1, 1], [], []>} : vector<48x128xf32>, vector<128x128xf32>, vector<48x128xf32> -> vector<48x128xf32>
    %c128 = arith.constant 128 : index
    %c0_27 = arith.constant 0 : index
    %53 = vector.load %arg5[%c128, %c0_27] : memref<256x128xf32, #tpu.memory_space<vmem>>, vector<128x128xf32>
    %cst_28 = arith.constant dense<0.000000e+00> : vector<48x128xf32>
    %54 = tpu.matmul %50, %53, %cst_28 {dimension_numbers = #tpu.dot_dimension_numbers<[1], [0], [0], [1], [0, 0, 1, 1], [], []>} : vector<48x128xf32>, vector<128x128xf32>, vector<48x128xf32> -> vector<48x128xf32>
    %55 = arith.addf %52, %54 : vector<48x128xf32>
    %c1_29 = arith.constant 1 : index
    %c0_30 = arith.constant 0 : index
    %56 = vector.load %arg6[%c1_29, %c0_30] : memref<2x128xf32, #tpu.memory_space<vmem>>, vector<1x128xf32>
    %57 = vector.broadcast %56 : vector<1x128xf32> to vector<48x128xf32>
    %58 = arith.addf %55, %57 : vector<48x128xf32>
    %cst_31 = arith.constant 0.000000e+00 : f32
    %59 = vector.broadcast %cst_31 : f32 to vector<48x128xf32>
    %60 = arith.maximumf %58, %59 : vector<48x128xf32>
    %c0_32 = arith.constant 0 : index
    %c0_33 = arith.constant 0 : index
    %61 = vector.load %arg7[%c0_32, %c0_33] : memref<48x128xf32, #tpu.memory_space<vmem>>, vector<48x128xf32>
    tpu.vector_store %arg7[%c0_32, %c0_33], %60 {strides = array<i32>} : memref<48x128xf32, #tpu.memory_space<vmem>>, vector<48x128xf32>,
    return
  }
  func.func @transform_0(%arg0: i32) -> (i32, i32) {
    %c0_i32 = arith.constant 0 : i32
    %c0_i32_0 = arith.constant 0 : i32
    return %arg0, %c0_i32 : i32, i32
  }
  func.func @transform_1(%arg0: i32) -> (i32, i32) {
    %c0_i32 = arith.constant 0 : i32
    %c0_i32_0 = arith.constant 0 : i32
    %c0_i32_1 = arith.constant 0 : i32
    return %c0_i32, %c0_i32_0 : i32, i32
  }
  func.func @transform_2(%arg0: i32) -> (i32, i32) {
    %c0_i32 = arith.constant 0 : i32
    %c0_i32_0 = arith.constant 0 : i32
    %c0_i32_1 = arith.constant 0 : i32
    return %c0_i32, %c0_i32_0 : i32, i32
  }
  func.func @transform_3(%arg0: i32) -> (i32, i32, i32) {
    %c0_i32 = arith.constant 0 : i32
    %c0_i32_0 = arith.constant 0 : i32
    %c0_i32_1 = arith.constant 0 : i32
    %c0_i32_2 = arith.constant 0 : i32
    return %c0_i32, %c0_i32_0, %c0_i32_1 : i32, i32, i32
  }
  func.func @transform_4(%arg0: i32) -> (i32, i32) {
    %c0_i32 = arith.constant 0 : i32
    %c0_i32_0 = arith.constant 0 : i32
    %c0_i32_1 = arith.constant 0 : i32
    return %c0_i32, %c0_i32_0 : i32, i32
  }
  func.func @transform_5(%arg0: i32) -> (i32, i32) {
    %c0_i32 = arith.constant 0 : i32
    %c0_i32_0 = arith.constant 0 : i32
    %c0_i32_1 = arith.constant 0 : i32
    return %c0_i32, %c0_i32_0 : i32, i32
  }
  func.func @transform_6(%arg0: i32) -> (i32, i32) {
    %c0_i32 = arith.constant 0 : i32
    %c0_i32_0 = arith.constant 0 : i32
    return %arg0, %c0_i32 : i32, i32
  }
}

</mosaic_0001>

<llo_original>
// kernel: tcn_block_forward.1
$region0: #{tcn_block_forward.1}
  #allocation0 [shape = 'u32[]', space=smem, size = 0x4, offset = 0x4, fixed_abs, tag = 'smem constant byte address 0x4 - core index']
  #allocation1 [shape = 'u32[144,128]{1,0:T(1,128)}', space=vmem, size = 0x12000, scoped, tag = 'internal scratch']
  %s0 = inlined_call_operand.vmem [shape: f32[48,128], index: 0, kind: input, shape index: {}]
  %s1 = inlined_call_operand.vmem [shape: f32[128,256], index: 1, kind: input, shape index: {}]
  %s2 = inlined_call_operand.vmem [shape: f32[1,256], index: 2, kind: input, shape index: {}]
  %s3 = inlined_call_operand.vmem [shape: f32[3,128,128], index: 3, kind: input, shape index: {}]
  %s4 = inlined_call_operand.vmem [shape: f32[256,128], index: 4, kind: input, shape index: {}]
  %s5 = inlined_call_operand.vmem [shape: f32[2,128], index: 5, kind: input, shape index: {}]
  %s6 = inlined_call_operand.vmem [shape: f32[48,128], index: 6, kind: output, shape index: {}]
  %s7 = sld [smem:[#allocation0]]
  $region34: #{tcn_block_forward.1} parent=0
    _
  %s9 = ssub.s32 1, %s7
  %s10 = scalar_select 0, %s9, %s7
  // Predicated region
  $region2: #{tcn_block_forward.1} parent=0 // pred_check
    _
  $region3: #{tcn_block_forward.1} parent=0 // pred_check_branch
    %12 = sbr.rel (0) target = $region5
  $region4: #{tcn_block_forward.1} parent=0 // pred_region
    _
  $region5: #{tcn_block_forward.1} parent=0 // pred_fallthru
    _
  // Predicated region
  $region6: #{tcn_block_forward.1} parent=0 // pred_check
    _
  $region7: #{tcn_block_forward.1} parent=0 // pred_check_branch
    %14 = sbr.rel (0) target = $region9
  $region8: #{tcn_block_forward.1} parent=0 // pred_region
    _
  $region9: #{tcn_block_forward.1} parent=0 // pred_fallthru
    _
  // Predicated region
  $region10: #{tcn_block_forward.1} parent=0 // pred_check
    _
  $region11: #{tcn_block_forward.1} parent=0 // pred_check_branch
    %16 = sbr.rel (0) target = $region13
  $region12: #{tcn_block_forward.1} parent=0 // pred_region
    _
  $region13: #{tcn_block_forward.1} parent=0 // pred_fallthru
    _
  // Predicated region
  $region14: #{tcn_block_forward.1} parent=0 // pred_check
    _
  $region15: #{tcn_block_forward.1} parent=0 // pred_check_branch
    %18 = sbr.rel (0) target = $region17
  $region16: #{tcn_block_forward.1} parent=0 // pred_region
    _
  $region17: #{tcn_block_forward.1} parent=0 // pred_fallthru
    _
  // Predicated region
  $region18: #{tcn_block_forward.1} parent=0 // pred_check
    _
  $region19: #{tcn_block_forward.1} parent=0 // pred_check_branch
    %20 = sbr.rel (0) target = $region21
  $region20: #{tcn_block_forward.1} parent=0 // pred_region
    _
  $region21: #{tcn_block_forward.1} parent=0 // pred_fallthru
    _
  // Predicated region
  $region22: #{tcn_block_forward.1} parent=0 // pred_check
    _
  $region23: #{tcn_block_forward.1} parent=0 // pred_check_branch
    %22 = sbr.rel (0) target = $region25
  $region24: #{tcn_block_forward.1} parent=0 // pred_region
    _
  $region25: #{tcn_block_forward.1} parent=0 // pred_fallthru
    _
  %v23 = vld [vmem:[%s0] sm:$0xff]
  %v24 = vld [vmem:[%s0 + $0x8] sm:$0xff]
  %v25 = vld [vmem:[%s0 + $0x10] sm:$0xff]
  %v26 = vld [vmem:[%s0 + $0x18] sm:$0xff]
  %v27 = vld [vmem:[%s0 + $0x20] sm:$0xff]
  %v28 = vld [vmem:[%s0 + $0x28] sm:$0xff]
  %v29 = vld [vmem:[%s1] sm:$0xff]
  %v30 = vld [vmem:[%s1 + $0x8] sm:$0xff]
  %v31 = vld [vmem:[%s1 + $0x10] sm:$0xff]
  %v32 = vld [vmem:[%s1 + $0x18] sm:$0xff]
  %v33 = vld [vmem:[%s1 + $0x20] sm:$0xff]
  %v34 = vld [vmem:[%s1 + $0x28] sm:$0xff]
  %v35 = vld [vmem:[%s1 + $0x30] sm:$0xff]
  %v36 = vld [vmem:[%s1 + $0x38] sm:$0xff]
  %v37 = vld [vmem:[%s1 + $0x40] sm:$0xff]
  %v38 = vld [vmem:[%s1 + $0x48] sm:$0xff]
  %v39 = vld [vmem:[%s1 + $0x50] sm:$0xff]
  %v40 = vld [vmem:[%s1 + $0x58] sm:$0xff]
  %v41 = vld [vmem:[%s1 + $0x60] sm:$0xff]
  %v42 = vld [vmem:[%s1 + $0x68] sm:$0xff]
  %v43 = vld [vmem:[%s1 + $0x70] sm:$0xff]
  %v44 = vld [vmem:[%s1 + $0x78] sm:$0xff]
  %v45 = vld [vmem:[%s1 + $0x80] sm:$0xff]
  %v46 = vld [vmem:[%s1 + $0x88] sm:$0xff]
  %v47 = vld [vmem:[%s1 + $0x90] sm:$0xff]
  %v48 = vld [vmem:[%s1 + $0x98] sm:$0xff]
  %v49 = vld [vmem:[%s1 + $0xa0] sm:$0xff]
  %v50 = vld [vmem:[%s1 + $0xa8] sm:$0xff]
  %v51 = vld [vmem:[%s1 + $0xb0] sm:$0xff]
  %v52 = vld [vmem:[%s1 + $0xb8] sm:$0xff]
  %v53 = vld [vmem:[%s1 + $0xc0] sm:$0xff]
  %v54 = vld [vmem:[%s1 + $0xc8] sm:$0xff]
  %v55 = vld [vmem:[%s1 + $0xd0] sm:$0xff]
  %v56 = vld [vmem:[%s1 + $0xd8] sm:$0xff]
  %v57 = vld [vmem:[%s1 + $0xe0] sm:$0xff]
  %v58 = vld [vmem:[%s1 + $0xe8] sm:$0xff]
  %v59 = vld [vmem:[%s1 + $0xf0] sm:$0xff]
  %v60 = vld [vmem:[%s1 + $0xf8] sm:$0xff]
  %v61 = vld [vmem:[%s2] sm:$0x3]
  %v63 = vlaneseq
  %v64 = vshrl.u32 %v63, 7
  %v65 = vsub.s32 0, %v64
  %v66 = vrot.slane %v61, %v65
  %v67 = vlaneseq
  %v68 = vshrl.u32 %v67, 7
  %v69 = vsub.s32 1, %v68
  %v70 = vrot.slane %v61, %v69
  %73 = vmatprep.subr.mxu0 %v30
  %74 = vmatpush1.msra.mxu0 %v29
  %75 = vmatprep.subr.mxu0 %v32
  %76 = vmatpush1.msra.mxu0 %v31
  %77 = vmatprep.subr.mxu0 %v34
  %78 = vmatpush1.msra.mxu0 %v33
  %79 = vmatprep.subr.mxu0 %v36
  %80 = vmatpush1.msra.mxu0 %v35
  %81 = vmatprep.subr.mxu0 %v38
  %82 = vmatpush1.msra.mxu0 %v37
  %83 = vmatprep.subr.mxu0 %v40
  %84 = vmatpush1.msra.mxu0 %v39
  %85 = vmatprep.subr.mxu0 %v42
  %86 = vmatpush1.msra.mxu0 %v41
  %87 = vmatprep.subr.mxu0 %v44
  %88 = vmatpush1.msra.mxu0 %v43
  %89 = vmatprep.subr.mxu0 %v46
  %90 = vmatpush1.msra.mxu0 %v45
  %91 = vmatprep.subr.mxu0 %v48
  %92 = vmatpush1.msra.mxu0 %v47
  %93 = vmatprep.subr.mxu0 %v50
  %94 = vmatpush1.msra.mxu0 %v49
  %95 = vmatprep.subr.mxu0 %v52
  %96 = vmatpush1.msra.mxu0 %v51
  %97 = vmatprep.subr.mxu0 %v54
  %98 = vmatpush1.msra.mxu0 %v53
  %99 = vmatprep.subr.mxu0 %v56
  %100 = vmatpush1.msra.mxu0 %v55
  %101 = vmatprep.subr.mxu0 %v58
  %102 = vmatpush1.msra.mxu0 %v57
  %103 = vmatprep.subr.mxu0 %v60
  %104 = vmatpush1.msra.mxu0 %v59
  %105 = vmatprep.subr.mxu0 0.0
  %106 = vmatpush1.msra.mxu0 0.0
  %107 = vmatprep.subr.mxu0 0.0
  %108 = vmatpush1.msra.mxu0 0.0
  %109 = vmatprep.subr.mxu0 0.0
  %110 = vmatpush1.msra.mxu0 0.0
  %111 = vmatprep.subr.mxu0 0.0
  %112 = vmatpush1.msra.mxu0 0.0
  %113 = vmatprep.subr.mxu0 0.0
  %114 = vmatpush1.msra.mxu0 0.0
  %115 = vmatprep.subr.mxu0 0.0
  %116 = vmatpush1.msra.mxu0 0.0
  %117 = vmatprep.subr.mxu0 0.0
  %118 = vmatpush1.msra.mxu0 0.0
  %119 = vmatprep.subr.mxu0 0.0
  %120 = vmatpush1.msra.mxu0 0.0
  %121 = vmatprep.subr.mxu0 0.0
  %122 = vmatpush1.msra.mxu0 0.0
  %123 = vmatprep.subr.mxu0 0.0
  %124 = vmatpush1.msra.mxu0 0.0
  %125 = vmatprep.subr.mxu0 0.0
  %126 = vmatpush1.msra.mxu0 0.0
  %127 = vmatprep.subr.mxu0 0.0
  %128 = vmatpush1.msra.mxu0 0.0
  %129 = vmatprep.subr.mxu0 0.0
  %130 = vmatpush1.msra.mxu0 0.0
  %131 = vmatprep.subr.mxu0 0.0
  %132 = vmatpush1.msra.mxu0 0.0
  %133 = vmatprep.subr.mxu0 0.0
  %134 = vmatpush1.msra.mxu0 0.0
  %135 = vmatprep.subr.mxu0 0.0
  %136 = vmatpush1.msra.mxu0 0.0
  %137 = vmatprep.mubr.f32.mxu0 0.0
  %138 = vmatmul.mubr.f32.gmra.mrb[0].mxu0 %v23
  %v139 = vpop.f32.mrb[0].mxu0
  %v140 = vadd.f32 %v66, %v139
  %v141 = vpop.f32.mrb[0].mxu0
  %v142 = vadd.f32 %v70, %v141
  %143 = vmatprep.mubr.f32.mxu0 0.0
  %144 = vmatmul.mubr.f32.gmra.mrb[0].mxu0 %v24
  %v145 = vpop.f32.mrb[0].mxu0
  %v146 = vadd.f32 %v66, %v145
  %v147 = vpop.f32.mrb[0].mxu0
  %v148 = vadd.f32 %v70, %v147
  %149 = vmatprep.mubr.f32.mxu0 0.0
  %150 = vmatmul.mubr.f32.gmra.mrb[0].mxu0 %v25
  %v151 = vpop.f32.mrb[0].mxu0
  %v152 = vadd.f32 %v66, %v151
  %v153 = vpop.f32.mrb[0].mxu0
  %v154 = vadd.f32 %v70, %v153
  %155 = vmatprep.mubr.f32.mxu0 0.0
  %156 = vmatmul.mubr.f32.gmra.mrb[0].mxu0 %v26
  %v157 = vpop.f32.mrb[0].mxu0
  %v158 = vadd.f32 %v66, %v157
  %v159 = vpop.f32.mrb[0].mxu0
  %v160 = vadd.f32 %v70, %v159
  %161 = vmatprep.mubr.f32.mxu0 0.0
  %162 = vmatmul.mubr.f32.gmra.mrb[0].mxu0 %v27
  %v163 = vpop.f32.mrb[0].mxu0
  %v164 = vadd.f32 %v66, %v163
  %v165 = vpop.f32.mrb[0].mxu0
  %v166 = vadd.f32 %v70, %v165
  %167 = vmatprep.mubr.f32.mxu0 0.0
  %168 = vmatmul.mubr.f32.gmra.mrb[0].mxu0 %v28
  %v169 = vpop.f32.mrb[0].mxu0
  %v170 = vadd.f32 %v66, %v169
  %v171 = vpop.f32.mrb[0].mxu0
  %v172 = vadd.f32 %v70, %v171
  %173 = vdwg.mxu0
  %v174 = vmax.f32 %v140, 0.0
  %v175 = vmax.f32 %v142, 0.0
  %v176 = vmax.f32 %v146, 0.0
  %v177 = vmax.f32 %v148, 0.0
  %v178 = vmax.f32 %v152, 0.0
  %v179 = vmax.f32 %v154, 0.0
  %v180 = vmax.f32 %v158, 0.0
  %v181 = vmax.f32 %v160, 0.0
  %v182 = vmax.f32 %v164, 0.0
  %v183 = vmax.f32 %v166, 0.0
  %v184 = vmax.f32 %v170, 0.0
  %v185 = vmax.f32 %v172, 0.0
  %v186 = vlaneseq
  %v187 = vshrl.u32 %v186, 7
  %v188 = vadd.s32 %v187, 8
  %v189 = vadd.s32 %v187, 16
  %v190 = vadd.s32 %v187, 24
  %v191 = vadd.s32 %v187, 32
  %v192 = vadd.s32 %v187, 40
  %vm193 = vcmp.lt.s32.totalorder %v187, 0
  %v194 = vsub.s32 0, %v187
  %v195 = vsel %vm193, %v194, %v187
  %v196 = vmul.u32.u64.compose %v195, 2863311531
  %v197 = vextract.low.u32 %v196
  %v198 = vextract.high.u32 %v196
  %v199 = vshrl.u32 %v198, 4
  %v200 = vmul.u32 %v199, 24
  %v201 = vsub.s32 %v195, %v200
  %v202 = vsub.s32 0, %v201
  %v203 = vsel %vm193, %v202, %v201
  %vm204 = vcmp.lt.s32.totalorder %v188, 0
  %v205 = vsub.s32 0, %v188
  %v206 = vsel %vm204, %v205, %v188
  %v207 = vmul.u32.u64.compose %v206, 2863311531
  %v208 = vextract.low.u32 %v207
  %v209 = vextract.high.u32 %v207
  %v210 = vshrl.u32 %v209, 4
  %v211 = vmul.u32 %v210, 24
  %v212 = vsub.s32 %v206, %v211
  %v213 = vsub.s32 0, %v212
  %v214 = vsel %vm204, %v213, %v212
  %vm215 = vcmp.lt.s32.totalorder %v189, 0
  %v216 = vsub.s32 0, %v189
  %v217 = vsel %vm215, %v216, %v189
  %v218 = vmul.u32.u64.compose %v217, 2863311531
  %v219 = vextract.low.u32 %v218
  %v220 = vextract.high.u32 %v218
  %v221 = vshrl.u32 %v220, 4
  %v222 = vmul.u32 %v221, 24
  %v223 = vsub.s32 %v217, %v222
  %v224 = vsub.s32 0, %v223
  %v225 = vsel %vm215, %v224, %v223
  %vm226 = vcmp.lt.s32.totalorder %v190, 0
  %v227 = vsub.s32 0, %v190
  %v228 = vsel %vm226, %v227, %v190
  %v229 = vmul.u32.u64.compose %v228, 2863311531
  %v230 = vextract.low.u32 %v229
  %v231 = vextract.high.u32 %v229
  %v232 = vshrl.u32 %v231, 4
  %v233 = vmul.u32 %v232, 24
  %v234 = vsub.s32 %v228, %v233
  %v235 = vsub.s32 0, %v234
  %v236 = vsel %vm226, %v235, %v234
  %vm237 = vcmp.lt.s32.totalorder %v191, 0
  %v238 = vsub.s32 0, %v191
  %v239 = vsel %vm237, %v238, %v191
  %v240 = vmul.u32.u64.compose %v239, 2863311531
  %v241 = vextract.low.u32 %v240
  %v242 = vextract.high.u32 %v240
  %v243 = vshrl.u32 %v242, 4
  %v244 = vmul.u32 %v243, 24
  %v245 = vsub.s32 %v239, %v244
  %v246 = vsub.s32 0, %v245
  %v247 = vsel %vm237, %v246, %v245
  %vm248 = vcmp.lt.s32.totalorder %v192, 0
  %v249 = vsub.s32 0, %v192
  %v250 = vsel %vm248, %v249, %v192
  %v251 = vmul.u32.u64.compose %v250, 2863311531
  %v252 = vextract.low.u32 %v251
  %v253 = vextract.high.u32 %v251
  %v254 = vshrl.u32 %v253, 4
  %v255 = vmul.u32 %v254, 24
  %v256 = vsub.s32 %v250, %v255
  %v257 = vsub.s32 0, %v256
  %v258 = vsel %vm248, %v257, %v256
  %vm259 = vcmp.ne.s32.totalorder %v203, 0
  %vm260 = vcmp.ne.s32.totalorder %v214, 0
  %vm261 = vcmp.ne.s32.totalorder %v225, 0
  %vm262 = vcmp.ne.s32.totalorder %v236, 0
  %vm263 = vcmp.ne.s32.totalorder %v247, 0
  %vm264 = vcmp.ne.s32.totalorder %v258, 0
  %vm265 = vcmp.lt.s32.totalorder %v203, 0
  %vm266 = vcmp.lt.s32.totalorder %v214, 0
  %vm267 = vcmp.lt.s32.totalorder %v225, 0
  %vm268 = vcmp.lt.s32.totalorder %v236, 0
  %vm269 = vcmp.lt.s32.totalorder %v247, 0
  %vm270 = vcmp.lt.s32.totalorder %v258, 0
  %vm271 = vmand %vm265, %vm259
  %vm272 = vmand %vm266, %vm260
  %vm273 = vmand %vm267, %vm261
  %vm274 = vmand %vm268, %vm262
  %vm275 = vmand %vm269, %vm263
  %vm276 = vmand %vm270, %vm264
  %v277 = vadd.s32 %v203, 24
  %v278 = vadd.s32 %v214, 24
  %v279 = vadd.s32 %v225, 24
  %v280 = vadd.s32 %v236, 24
  %v281 = vadd.s32 %v247, 24
  %v282 = vadd.s32 %v258, 24
  %v283 = vsel %vm271, %v277, %v203
  %v284 = vsel %vm272, %v278, %v214
  %v285 = vsel %vm273, %v279, %v225
  %v286 = vsel %vm274, %v280, %v236
  %v287 = vsel %vm275, %v281, %v247
  %v288 = vsel %vm276, %v282, %v258
  %vm289 = vcmp.lt.s32.totalorder %v283, 16
  %vm290 = vcmp.lt.s32.totalorder %v284, 16
  %vm291 = vcmp.lt.s32.totalorder %v285, 16
  %vm292 = vcmp.lt.s32.totalorder %v286, 16
  %vm293 = vcmp.lt.s32.totalorder %v287, 16
  %vm294 = vcmp.lt.s32.totalorder %v288, 16
  %v295 = vsel %vm289, 1, 0
  %v296 = vsel %vm290, 1, 0
  %v297 = vsel %vm291, 1, 0
  %v298 = vsel %vm292, 1, 0
  %v299 = vsel %vm293, 1, 0
  %v300 = vsel %vm294, 1, 0
  %vm301 = vcmp.eq.s32.totalorder %v295, 1
  %vm302 = vcmp.eq.s32.totalorder %v296, 1
  %vm303 = vcmp.eq.s32.totalorder %v297, 1
  %vm304 = vcmp.eq.s32.totalorder %v298, 1
  %vm305 = vcmp.eq.s32.totalorder %v299, 1
  %vm306 = vcmp.eq.s32.totalorder %v300, 1
  %v307 = vsel %vm301, %v175, 0.0
  %v308 = vsel %vm302, %v177, 0.0
  %v309 = vsel %vm303, %v179, 0.0
  %v310 = vsel %vm304, %v181, 0.0
  %v311 = vsel %vm305, %v183, 0.0
  %v312 = vsel %vm306, %v185, 0.0
  %v313 = vrot.slane %v307, 7
  %v314 = vrot.slane %v308, 7
  %v315 = vrot.slane %v309, 7
  %v316 = vrot.slane %v310, 7
  %v317 = vrot.slane %v311, 7
  %v318 = vrot.slane %v312, 7
  %vm319 = vcmp.lt.s32.totalorder %v187, 1
  %v320 = vsel %vm319, %v317, %v318
  %v321 = vsel %vm319, %v316, %v317
  %v322 = vsel %vm319, %v315, %v316
  %v323 = vsel %vm319, %v314, %v315
  %v324 = vsel %vm319, %v313, %v314
  %v325 = vsel %vm319, %v318, %v313
  %v326 = vrot.slane %v307, 1
  %v327 = vrot.slane %v308, 1
  %v328 = vrot.slane %v309, 1
  %v329 = vrot.slane %v310, 1
  %v330 = vrot.slane %v311, 1
  %v331 = vrot.slane %v312, 1
  %vm332 = vcmp.lt.s32.totalorder %v187, 7
  %v333 = vsel %vm332, %v330, %v331
  %v334 = vsel %vm332, %v329, %v330
  %v335 = vsel %vm332, %v328, %v329
  %v336 = vsel %vm332, %v327, %v328
  %v337 = vsel %vm332, %v326, %v327
  %v338 = vsel %vm332, %v331, %v326
  %v339 = vld [vmem:[%s3] sm:$0xff]
  %v340 = vld [vmem:[%s3 + $0x8] sm:$0xff]
  %v341 = vld [vmem:[%s3 + $0x10] sm:$0xff]
  %v342 = vld [vmem:[%s3 + $0x18] sm:$0xff]
  %v343 = vld [vmem:[%s3 + $0x20] sm:$0xff]
  %v344 = vld [vmem:[%s3 + $0x28] sm:$0xff]
  %v345 = vld [vmem:[%s3 + $0x30] sm:$0xff]
  %v346 = vld [vmem:[%s3 + $0x38] sm:$0xff]
  %v347 = vld [vmem:[%s3 + $0x40] sm:$0xff]
  %v348 = vld [vmem:[%s3 + $0x48] sm:$0xff]
  %v349 = vld [vmem:[%s3 + $0x50] sm:$0xff]
  %v350 = vld [vmem:[%s3 + $0x58] sm:$0xff]
  %v351 = vld [vmem:[%s3 + $0x60] sm:$0xff]
  %v352 = vld [vmem:[%s3 + $0x68] sm:$0xff]
  %v353 = vld [vmem:[%s3 + $0x70] sm:$0xff]
  %v354 = vld [vmem:[%s3 + $0x78] sm:$0xff]
  %s355 = scalar_lea.vmem %s3, 128
  %v356 = vld [vmem:[%s355] sm:$0xff]
  %v357 = vld [vmem:[%s355 + $0x8] sm:$0xff]
  %v358 = vld [vmem:[%s355 + $0x10] sm:$0xff]
  %v359 = vld [vmem:[%s355 + $0x18] sm:$0xff]
  %v360 = vld [vmem:[%s355 + $0x20] sm:$0xff]
  %v361 = vld [vmem:[%s355 + $0x28] sm:$0xff]
  %v362 = vld [vmem:[%s355 + $0x30] sm:$0xff]
  %v363 = vld [vmem:[%s355 + $0x38] sm:$0xff]
  %v364 = vld [vmem:[%s355 + $0x40] sm:$0xff]
  %v365 = vld [vmem:[%s355 + $0x48] sm:$0xff]
  %v366 = vld [vmem:[%s355 + $0x50] sm:$0xff]
  %v367 = vld [vmem:[%s355 + $0x58] sm:$0xff]
  %v368 = vld [vmem:[%s355 + $0x60] sm:$0xff]
  %v369 = vld [vmem:[%s355 + $0x68] sm:$0xff]
  %v370 = vld [vmem:[%s355 + $0x70] sm:$0xff]
  %v371 = vld [vmem:[%s355 + $0x78] sm:$0xff]
  %372 = vmatprep.subr.mxu0 0.0
  %373 = vmatpush1.msra.mxu0 %v356
  %374 = vmatprep.subr.mxu0 0.0
  %375 = vmatpush1.msra.mxu0 %v357
  %376 = vmatprep.subr.mxu0 0.0
  %377 = vmatpush1.msra.mxu0 %v358
  %378 = vmatprep.subr.mxu0 0.0
  %379 = vmatpush1.msra.mxu0 %v359
  %380 = vmatprep.subr.mxu0 0.0
  %381 = vmatpush1.msra.mxu0 %v360
  %382 = vmatprep.subr.mxu0 0.0
  %383 = vmatpush1.msra.mxu0 %v361
  %384 = vmatprep.subr.mxu0 0.0
  %385 = vmatpush1.msra.mxu0 %v362
  %386 = vmatprep.subr.mxu0 0.0
  %387 = vmatpush1.msra.mxu0 %v363
  %388 = vmatprep.subr.mxu0 0.0
  %389 = vmatpush1.msra.mxu0 %v364
  %390 = vmatprep.subr.mxu0 0.0
  %391 = vmatpush1.msra.mxu0 %v365
  %392 = vmatprep.subr.mxu0 0.0
  %393 = vmatpush1.msra.mxu0 %v366
  %394 = vmatprep.subr.mxu0 0.0
  %395 = vmatpush1.msra.mxu0 %v367
  %396 = vmatprep.subr.mxu0 0.0
  %397 = vmatpush1.msra.mxu0 %v368
  %398 = vmatprep.subr.mxu0 0.0
  %399 = vmatpush1.msra.mxu0 %v369
  %400 = vmatprep.subr.mxu0 0.0
  %401 = vmatpush1.msra.mxu0 %v370
  %402 = vmatprep.subr.mxu0 0.0
  %403 = vmatpush1.msra.mxu0 %v371
  %404 = vmatprep.subr.mxu0 0.0
  %405 = vmatpush1.msra.mxu0 0.0
  %406 = vmatprep.subr.mxu0 0.0
  %407 = vmatpush1.msra.mxu0 0.0
  %408 = vmatprep.subr.mxu0 0.0
  %409 = vmatpush1.msra.mxu0 0.0
  %410 = vmatprep.subr.mxu0 0.0
  %411 = vmatpush1.msra.mxu0 0.0
  %412 = vmatprep.subr.mxu0 0.0
  %413 = vmatpush1.msra.mxu0 0.0
  %414 = vmatprep.subr.mxu0 0.0
  %415 = vmatpush1.msra.mxu0 0.0
  %416 = vmatprep.subr.mxu0 0.0
  %417 = vmatpush1.msra.mxu0 0.0
  %418 = vmatprep.subr.mxu0 0.0
  %419 = vmatpush1.msra.mxu0 0.0
  %420 = vmatprep.subr.mxu0 0.0
  %421 = vmatpush1.msra.mxu0 0.0
  %422 = vmatprep.subr.mxu0 0.0
  %423 = vmatpush1.msra.mxu0 0.0
  %424 = vmatprep.subr.mxu0 0.0
  %425 = vmatpush1.msra.mxu0 0.0
  %426 = vmatprep.subr.mxu0 0.0
  %427 = vmatpush1.msra.mxu0 0.0
  %428 = vmatprep.subr.mxu0 0.0
  %429 = vmatpush1.msra.mxu0 0.0
  %430 = vmatprep.subr.mxu0 0.0
  %431 = vmatpush1.msra.mxu0 0.0
  %432 = vmatprep.subr.mxu0 0.0
  %433 = vmatpush1.msra.mxu0 0.0
  %434 = vmatprep.subr.mxu0 0.0
  %435 = vmatpush1.msra.mxu0 0.0
  %436 = vmatprep.mubr.f32.mxu0 0.0
  %437 = vmatmul.mubr.f32.gmra.mrb[0].mxu0 %v307
  %v438 = vpop.f32.mrb[0].mxu0
  %v439 = vadd.f32 0.0, %v438
  %v440 = vpop.f32.mrb[0].mxu0
  %441 = vmatprep.mubr.f32.mxu0 0.0
  %442 = vmatmul.mubr.f32.gmra.mrb[0].mxu0 %v308
  %v443 = vpop.f32.mrb[0].mxu0
  %v444 = vadd.f32 0.0, %v443
  %v445 = vpop.f32.mrb[0].mxu0
  %446 = vmatprep.mubr.f32.mxu0 0.0
  %447 = vmatmul.mubr.f32.gmra.mrb[0].mxu0 %v309
  %v448 = vpop.f32.mrb[0].mxu0
  %v449 = vadd.f32 0.0, %v448
  %v450 = vpop.f32.mrb[0].mxu0
  %451 = vmatprep.mubr.f32.mxu0 0.0
  %452 = vmatmul.mubr.f32.gmra.mrb[0].mxu0 %v310
  %v453 = vpop.f32.mrb[0].mxu0
  %v454 = vadd.f32 0.0, %v453
  %v455 = vpop.f32.mrb[0].mxu0
  %456 = vmatprep.mubr.f32.mxu0 0.0
  %457 = vmatmul.mubr.f32.gmra.mrb[0].mxu0 %v311
  %v458 = vpop.f32.mrb[0].mxu0
  %v459 = vadd.f32 0.0, %v458
  %v460 = vpop.f32.mrb[0].mxu0
  %461 = vmatprep.mubr.f32.mxu0 0.0
  %462 = vmatmul.mubr.f32.gmra.mrb[0].mxu0 %v312
  %v463 = vpop.f32.mrb[0].mxu0
  %v464 = vadd.f32 0.0, %v463
  %v465 = vpop.f32.mrb[0].mxu0
  %466 = vdwg.mxu0
  %467 = vmatprep.subr.mxu0 0.0
  %468 = vmatpush1.msra.mxu0 %v339
  %469 = vmatprep.subr.mxu0 0.0
  %470 = vmatpush1.msra.mxu0 %v340
  %471 = vmatprep.subr.mxu0 0.0
  %472 = vmatpush1.msra.mxu0 %v341
  %473 = vmatprep.subr.mxu0 0.0
  %474 = vmatpush1.msra.mxu0 %v342
  %475 = vmatprep.subr.mxu0 0.0
  %476 = vmatpush1.msra.mxu0 %v343
  %477 = vmatprep.subr.mxu0 0.0
  %478 = vmatpush1.msra.mxu0 %v344
  %479 = vmatprep.subr.mxu0 0.0
  %480 = vmatpush1.msra.mxu0 %v345
  %481 = vmatprep.subr.mxu0 0.0
  %482 = vmatpush1.msra.mxu0 %v346
  %483 = vmatprep.subr.mxu0 0.0
  %484 = vmatpush1.msra.mxu0 %v347
  %485 = vmatprep.subr.mxu0 0.0
  %486 = vmatpush1.msra.mxu0 %v348
  %487 = vmatprep.subr.mxu0 0.0
  %488 = vmatpush1.msra.mxu0 %v349
  %489 = vmatprep.subr.mxu0 0.0
  %490 = vmatpush1.msra.mxu0 %v350
  %491 = vmatprep.subr.mxu0 0.0
  %492 = vmatpush1.msra.mxu0 %v351
  %493 = vmatprep.subr.mxu0 0.0
  %494 = vmatpush1.msra.mxu0 %v352
  %495 = vmatprep.subr.mxu0 0.0
  %496 = vmatpush1.msra.mxu0 %v353
  %497 = vmatprep.subr.mxu0 0.0
  %498 = vmatpush1.msra.mxu0 %v354
  %499 = vmatprep.subr.mxu0 0.0
  %500 = vmatpush1.msra.mxu0 0.0
  %501 = vmatprep.subr.mxu0 0.0
  %502 = vmatpush1.msra.mxu0 0.0
  %503 = vmatprep.subr.mxu0 0.0
  %504 = vmatpush1.msra.mxu0 0.0
  %505 = vmatprep.subr.mxu0 0.0
  %506 = vmatpush1.msra.mxu0 0.0
  %507 = vmatprep.subr.mxu0 0.0
  %508 = vmatpush1.msra.mxu0 0.0
  %509 = vmatprep.subr.mxu0 0.0
  %510 = vmatpush1.msra.mxu0 0.0
  %511 = vmatprep.subr.mxu0 0.0
  %512 = vmatpush1.msra.mxu0 0.0
  %513 = vmatprep.subr.mxu0 0.0
  %514 = vmatpush1.msra.mxu0 0.0
  %515 = vmatprep.subr.mxu0 0.0
  %516 = vmatpush1.msra.mxu0 0.0
  %517 = vmatprep.subr.mxu0 0.0
  %518 = vmatpush1.msra.mxu0 0.0
  %519 = vmatprep.subr.mxu0 0.0
  %520 = vmatpush1.msra.mxu0 0.0
  %521 = vmatprep.subr.mxu0 0.0
  %522 = vmatpush1.msra.mxu0 0.0
  %523 = vmatprep.subr.mxu0 0.0
  %524 = vmatpush1.msra.mxu0 0.0
  %525 = vmatprep.subr.mxu0 0.0
  %526 = vmatpush1.msra.mxu0 0.0
  %527 = vmatprep.subr.mxu0 0.0
  %528 = vmatpush1.msra.mxu0 0.0
  %529 = vmatprep.subr.mxu0 0.0
  %530 = vmatpush1.msra.mxu0 0.0
  %531 = vmatprep.mubr.f32.mxu0 0.0
  %532 = vmatmul.mubr.f32.gmra.mrb[0].mxu0 %v325
  %v533 = vpop.f32.mrb[0].mxu0
  %v534 = vadd.f32 %v439, %v533
  %v535 = vpop.f32.mrb[0].mxu0
  %536 = vmatprep.mubr.f32.mxu0 0.0
  %537 = vmatmul.mubr.f32.gmra.mrb[0].mxu0 %v324
  %v538 = vpop.f32.mrb[0].mxu0
  %v539 = vadd.f32 %v444, %v538
  %v540 = vpop.f32.mrb[0].mxu0
  %541 = vmatprep.mubr.f32.mxu0 0.0
  %542 = vmatmul.mubr.f32.gmra.mrb[0].mxu0 %v323
  %v543 = vpop.f32.mrb[0].mxu0
  %v544 = vadd.f32 %v449, %v543
  %v545 = vpop.f32.mrb[0].mxu0
  %546 = vmatprep.mubr.f32.mxu0 0.0
  %547 = vmatmul.mubr.f32.gmra.mrb[0].mxu0 %v322
  %v548 = vpop.f32.mrb[0].mxu0
  %v549 = vadd.f32 %v454, %v548
  %v550 = vpop.f32.mrb[0].mxu0
  %551 = vmatprep.mubr.f32.mxu0 0.0
  %552 = vmatmul.mubr.f32.gmra.mrb[0].mxu0 %v321
  %v553 = vpop.f32.mrb[0].mxu0
  %v554 = vadd.f32 %v459, %v553
  %v555 = vpop.f32.mrb[0].mxu0
  %556 = vmatprep.mubr.f32.mxu0 0.0
  %557 = vmatmul.mubr.f32.gmra.mrb[0].mxu0 %v320
  %v558 = vpop.f32.mrb[0].mxu0
  %v559 = vadd.f32 %v464, %v558
  %v560 = vpop.f32.mrb[0].mxu0
  %561 = vdwg.mxu0
  %s562 = scalar_lea.vmem %s3, 256
  %v563 = vld [vmem:[%s562] sm:$0xff]
  %v564 = vld [vmem:[%s562 + $0x8] sm:$0xff]
  %v565 = vld [vmem:[%s562 + $0x10] sm:$0xff]
  %v566 = vld [vmem:[%s562 + $0x18] sm:$0xff]
  %v567 = vld [vmem:[%s562 + $0x20] sm:$0xff]
  %v568 = vld [vmem:[%s562 + $0x28] sm:$0xff]
  %v569 = vld [vmem:[%s562 + $0x30] sm:$0xff]
  %v570 = vld [vmem:[%s562 + $0x38] sm:$0xff]
  %v571 = vld [vmem:[%s562 + $0x40] sm:$0xff]
  %v572 = vld [vmem:[%s562 + $0x48] sm:$0xff]
  %v573 = vld [vmem:[%s562 + $0x50] sm:$0xff]
  %v574 = vld [vmem:[%s562 + $0x58] sm:$0xff]
  %v575 = vld [vmem:[%s562 + $0x60] sm:$0xff]
  %v576 = vld [vmem:[%s562 + $0x68] sm:$0xff]
  %v577 = vld [vmem:[%s562 + $0x70] sm:$0xff]
  %v578 = vld [vmem:[%s562 + $0x78] sm:$0xff]
  %579 = vmatprep.subr.mxu0 0.0
  %580 = vmatpush1.msra.mxu0 %v563
  %581 = vmatprep.subr.mxu0 0.0
  %582 = vmatpush1.msra.mxu0 %v564
  %583 = vmatprep.subr.mxu0 0.0
  %584 = vmatpush1.msra.mxu0 %v565
  %585 = vmatprep.subr.mxu0 0.0
  %586 = vmatpush1.msra.mxu0 %v566
  %587 = vmatprep.subr.mxu0 0.0
  %588 = vmatpush1.msra.mxu0 %v567
  %589 = vmatprep.subr.mxu0 0.0
  %590 = vmatpush1.msra.mxu0 %v568
  %591 = vmatprep.subr.mxu0 0.0
  %592 = vmatpush1.msra.mxu0 %v569
  %593 = vmatprep.subr.mxu0 0.0
  %594 = vmatpush1.msra.mxu0 %v570
  %595 = vmatprep.subr.mxu0 0.0
  %596 = vmatpush1.msra.mxu0 %v571
  %597 = vmatprep.subr.mxu0 0.0
  %598 = vmatpush1.msra.mxu0 %v572
  %599 = vmatprep.subr.mxu0 0.0
  %600 = vmatpush1.msra.mxu0 %v573
  %601 = vmatprep.subr.mxu0 0.0
  %602 = vmatpush1.msra.mxu0 %v574
  %603 = vmatprep.subr.mxu0 0.0
  %604 = vmatpush1.msra.mxu0 %v575
  %605 = vmatprep.subr.mxu0 0.0
  %606 = vmatpush1.msra.mxu0 %v576
  %607 = vmatprep.subr.mxu0 0.0
  %608 = vmatpush1.msra.mxu0 %v577
  %609 = vmatprep.subr.mxu0 0.0
  %610 = vmatpush1.msra.mxu0 %v578
  %611 = vmatprep.subr.mxu0 0.0
  %612 = vmatpush1.msra.mxu0 0.0
  %613 = vmatprep.subr.mxu0 0.0
  %614 = vmatpush1.msra.mxu0 0.0
  %615 = vmatprep.subr.mxu0 0.0
  %616 = vmatpush1.msra.mxu0 0.0
  %617 = vmatprep.subr.mxu0 0.0
  %618 = vmatpush1.msra.mxu0 0.0
  %619 = vmatprep.subr.mxu0 0.0
  %620 = vmatpush1.msra.mxu0 0.0
  %621 = vmatprep.subr.mxu0 0.0
  %622 = vmatpush1.msra.mxu0 0.0
  %623 = vmatprep.subr.mxu0 0.0
  %624 = vmatpush1.msra.mxu0 0.0
  %625 = vmatprep.subr.mxu0 0.0
  %626 = vmatpush1.msra.mxu0 0.0
  %627 = vmatprep.subr.mxu0 0.0
  %628 = vmatpush1.msra.mxu0 0.0
  %629 = vmatprep.subr.mxu0 0.0
  %630 = vmatpush1.msra.mxu0 0.0
  %631 = vmatprep.subr.mxu0 0.0
  %632 = vmatpush1.msra.mxu0 0.0
  %633 = vmatprep.subr.mxu0 0.0
  %634 = vmatpush1.msra.mxu0 0.0
  %635 = vmatprep.subr.mxu0 0.0
  %636 = vmatpush1.msra.mxu0 0.0
  %637 = vmatprep.subr.mxu0 0.0
  %638 = vmatpush1.msra.mxu0 0.0
  %639 = vmatprep.subr.mxu0 0.0
  %640 = vmatpush1.msra.mxu0 0.0
  %641 = vmatprep.subr.mxu0 0.0
  %642 = vmatpush1.msra.mxu0 0.0
  %643 = vmatprep.mubr.f32.mxu0 0.0
  %644 = vmatmul.mubr.f32.gmra.mrb[0].mxu0 %v337
  %v645 = vpop.f32.mrb[0].mxu0
  %v646 = vadd.f32 0.0, %v645
  %v647 = vpop.f32.mrb[0].mxu0
  %648 = vmatprep.mubr.f32.mxu0 0.0
  %649 = vmatmul.mubr.f32.gmra.mrb[0].mxu0 %v336
  %v650 = vpop.f32.mrb[0].mxu0
  %v651 = vadd.f32 0.0, %v650
  %v652 = vpop.f32.mrb[0].mxu0
  %653 = vmatprep.mubr.f32.mxu0 0.0
  %654 = vmatmul.mubr.f32.gmra.mrb[0].mxu0 %v335
  %v655 = vpop.f32.mrb[0].mxu0
  %v656 = vadd.f32 0.0, %v655
  %v657 = vpop.f32.mrb[0].mxu0
  %658 = vmatprep.mubr.f32.mxu0 0.0
  %659 = vmatmul.mubr.f32.gmra.mrb[0].mxu0 %v334
  %v660 = vpop.f32.mrb[0].mxu0
  %v661 = vadd.f32 0.0, %v660
  %v662 = vpop.f32.mrb[0].mxu0
  %663 = vmatprep.mubr.f32.mxu0 0.0
  %664 = vmatmul.mubr.f32.gmra.mrb[0].mxu0 %v333
  %v665 = vpop.f32.mrb[0].mxu0
  %v666 = vadd.f32 0.0, %v665
  %v667 = vpop.f32.mrb[0].mxu0
  %668 = vmatprep.mubr.f32.mxu0 0.0
  %669 = vmatmul.mubr.f32.gmra.mrb[0].mxu0 %v338
  %v670 = vpop.f32.mrb[0].mxu0
  %v671 = vadd.f32 0.0, %v670
  %v672 = vpop.f32.mrb[0].mxu0
  %673 = vdwg.mxu0
  %v674 = vadd.f32 %v534, %v646
  %v675 = vadd.f32 %v539, %v651
  %v676 = vadd.f32 %v544, %v656
  %v677 = vadd.f32 %v549, %v661
  %v678 = vadd.f32 %v554, %v666
  %v679 = vadd.f32 %v559, %v671
  %v680 = vld [vmem:[%s5] sm:$0x1]
  %v681 = vlaneseq
  %v682 = vshrl.u32 %v681, 7
  %v683 = vsub.s32 0, %v682
  %v684 = vrot.slane %v680, %v683
  %v685 = vadd.f32 %v674, %v684
  %v686 = vadd.f32 %v675, %v684
  %v687 = vadd.f32 %v676, %v684
  %v688 = vadd.f32 %v677, %v684
  %v689 = vadd.f32 %v678, %v684
  %v690 = vadd.f32 %v679, %v684
  %v691 = vmax.f32 %v685, 0.0
  %v692 = vmax.f32 %v686, 0.0
  %v693 = vmax.f32 %v687, 0.0
  %v694 = vmax.f32 %v688, 0.0
  %v695 = vmax.f32 %v689, 0.0
  %v696 = vmax.f32 %v690, 0.0
  %v697 = vld [vmem:[%s4] sm:$0xff]
  %v698 = vld [vmem:[%s4 + $0x8] sm:$0xff]
  %v699 = vld [vmem:[%s4 + $0x10] sm:$0xff]
  %v700 = vld [vmem:[%s4 + $0x18] sm:$0xff]
  %v701 = vld [vmem:[%s4 + $0x20] sm:$0xff]
  %v702 = vld [vmem:[%s4 + $0x28] sm:$0xff]
  %v703 = vld [vmem:[%s4 + $0x30] sm:$0xff]
  %v704 = vld [vmem:[%s4 + $0x38] sm:$0xff]
  %v705 = vld [vmem:[%s4 + $0x40] sm:$0xff]
  %v706 = vld [vmem:[%s4 + $0x48] sm:$0xff]
  %v707 = vld [vmem:[%s4 + $0x50] sm:$0xff]
  %v708 = vld [vmem:[%s4 + $0x58] sm:$0xff]
  %v709 = vld [vmem:[%s4 + $0x60] sm:$0xff]
  %v710 = vld [vmem:[%s4 + $0x68] sm:$0xff]
  %v711 = vld [vmem:[%s4 + $0x70] sm:$0xff]
  %v712 = vld [vmem:[%s4 + $0x78] sm:$0xff]
  %v713 = vld [vmem:[%s4 + $0x80] sm:$0xff]
  %v714 = vld [vmem:[%s4 + $0x88] sm:$0xff]
  %v715 = vld [vmem:[%s4 + $0x90] sm:$0xff]
  %v716 = vld [vmem:[%s4 + $0x98] sm:$0xff]
  %v717 = vld [vmem:[%s4 + $0xa0] sm:$0xff]
  %v718 = vld [vmem:[%s4 + $0xa8] sm:$0xff]
  %v719 = vld [vmem:[%s4 + $0xb0] sm:$0xff]
  %v720 = vld [vmem:[%s4 + $0xb8] sm:$0xff]
  %v721 = vld [vmem:[%s4 + $0xc0] sm:$0xff]
  %v722 = vld [vmem:[%s4 + $0xc8] sm:$0xff]
  %v723 = vld [vmem:[%s4 + $0xd0] sm:$0xff]
  %v724 = vld [vmem:[%s4 + $0xd8] sm:$0xff]
  %v725 = vld [vmem:[%s4 + $0xe0] sm:$0xff]
  %v726 = vld [vmem:[%s4 + $0xe8] sm:$0xff]
  %v727 = vld [vmem:[%s4 + $0xf0] sm:$0xff]
  %v728 = vld [vmem:[%s4 + $0xf8] sm:$0xff]
  %729 = vmatprep.subr.mxu0 0.0
  %730 = vmatpush1.msra.mxu0 %v713
  %731 = vmatprep.subr.mxu0 0.0
  %732 = vmatpush1.msra.mxu0 %v714
  %733 = vmatprep.subr.mxu0 0.0
  %734 = vmatpush1.msra.mxu0 %v715
  %735 = vmatprep.subr.mxu0 0.0
  %736 = vmatpush1.msra.mxu0 %v716
  %737 = vmatprep.subr.mxu0 0.0
  %738 = vmatpush1.msra.mxu0 %v717
  %739 = vmatprep.subr.mxu0 0.0
  %740 = vmatpush1.msra.mxu0 %v718
  %741 = vmatprep.subr.mxu0 0.0
  %742 = vmatpush1.msra.mxu0 %v719
  %743 = vmatprep.subr.mxu0 0.0
  %744 = vmatpush1.msra.mxu0 %v720
  %745 = vmatprep.subr.mxu0 0.0
  %746 = vmatpush1.msra.mxu0 %v721
  %747 = vmatprep.subr.mxu0 0.0
  %748 = vmatpush1.msra.mxu0 %v722
  %749 = vmatprep.subr.mxu0 0.0
  %750 = vmatpush1.msra.mxu0 %v723
  %751 = vmatprep.subr.mxu0 0.0
  %752 = vmatpush1.msra.mxu0 %v724
  %753 = vmatprep.subr.mxu0 0.0
  %754 = vmatpush1.msra.mxu0 %v725
  %755 = vmatprep.subr.mxu0 0.0
  %756 = vmatpush1.msra.mxu0 %v726
  %757 = vmatprep.subr.mxu0 0.0
  %758 = vmatpush1.msra.mxu0 %v727
  %759 = vmatprep.subr.mxu0 0.0
  %760 = vmatpush1.msra.mxu0 %v728
  %761 = vmatprep.subr.mxu0 0.0
  %762 = vmatpush1.msra.mxu0 0.0
  %763 = vmatprep.subr.mxu0 0.0
  %764 = vmatpush1.msra.mxu0 0.0
  %765 = vmatprep.subr.mxu0 0.0
  %766 = vmatpush1.msra.mxu0 0.0
  %767 = vmatprep.subr.mxu0 0.0
  %768 = vmatpush1.msra.mxu0 0.0
  %769 = vmatprep.subr.mxu0 0.0
  %770 = vmatpush1.msra.mxu0 0.0
  %771 = vmatprep.subr.mxu0 0.0
  %772 = vmatpush1.msra.mxu0 0.0
  %773 = vmatprep.subr.mxu0 0.0
  %774 = vmatpush1.msra.mxu0 0.0
  %775 = vmatprep.subr.mxu0 0.0
  %776 = vmatpush1.msra.mxu0 0.0
  %777 = vmatprep.subr.mxu0 0.0
  %778 = vmatpush1.msra.mxu0 0.0
  %779 = vmatprep.subr.mxu0 0.0
  %780 = vmatpush1.msra.mxu0 0.0
  %781 = vmatprep.subr.mxu0 0.0
  %782 = vmatpush1.msra.mxu0 0.0
  %783 = vmatprep.subr.mxu0 0.0
  %784 = vmatpush1.msra.mxu0 0.0
  %785 = vmatprep.subr.mxu0 0.0
  %786 = vmatpush1.msra.mxu0 0.0
  %787 = vmatprep.subr.mxu0 0.0
  %788 = vmatpush1.msra.mxu0 0.0
  %789 = vmatprep.subr.mxu0 0.0
  %790 = vmatpush1.msra.mxu0 0.0
  %791 = vmatprep.subr.mxu0 0.0
  %792 = vmatpush1.msra.mxu0 0.0
  %793 = vmatprep.mubr.f32.mxu0 0.0
  %794 = vmatmul.mubr.f32.gmra.mrb[0].mxu0 %v691
  %v795 = vpop.f32.mrb[0].mxu0
  %v796 = vadd.f32 0.0, %v795
  %v797 = vpop.f32.mrb[0].mxu0
  %798 = vmatprep.mubr.f32.mxu0 0.0
  %799 = vmatmul.mubr.f32.gmra.mrb[0].mxu0 %v692
  %v800 = vpop.f32.mrb[0].mxu0
  %v801 = vadd.f32 0.0, %v800
  %v802 = vpop.f32.mrb[0].mxu0
  %803 = vmatprep.mubr.f32.mxu0 0.0
  %804 = vmatmul.mubr.f32.gmra.mrb[0].mxu0 %v693
  %v805 = vpop.f32.mrb[0].mxu0
  %v806 = vadd.f32 0.0, %v805
  %v807 = vpop.f32.mrb[0].mxu0
  %808 = vmatprep.mubr.f32.mxu0 0.0
  %809 = vmatmul.mubr.f32.gmra.mrb[0].mxu0 %v694
  %v810 = vpop.f32.mrb[0].mxu0
  %v811 = vadd.f32 0.0, %v810
  %v812 = vpop.f32.mrb[0].mxu0
  %813 = vmatprep.mubr.f32.mxu0 0.0
  %814 = vmatmul.mubr.f32.gmra.mrb[0].mxu0 %v695
  %v815 = vpop.f32.mrb[0].mxu0
  %v816 = vadd.f32 0.0, %v815
  %v817 = vpop.f32.mrb[0].mxu0
  %818 = vmatprep.mubr.f32.mxu0 0.0
  %819 = vmatmul.mubr.f32.gmra.mrb[0].mxu0 %v696
  %v820 = vpop.f32.mrb[0].mxu0
  %v821 = vadd.f32 0.0, %v820
  %v822 = vpop.f32.mrb[0].mxu0
  %823 = vdwg.mxu0
  %824 = vmatprep.subr.mxu0 0.0
  %825 = vmatpush1.msra.mxu0 %v697
  %826 = vmatprep.subr.mxu0 0.0
  %827 = vmatpush1.msra.mxu0 %v698
  %828 = vmatprep.subr.mxu0 0.0
  %829 = vmatpush1.msra.mxu0 %v699
  %830 = vmatprep.subr.mxu0 0.0
  %831 = vmatpush1.msra.mxu0 %v700
  %832 = vmatprep.subr.mxu0 0.0
  %833 = vmatpush1.msra.mxu0 %v701
  %834 = vmatprep.subr.mxu0 0.0
  %835 = vmatpush1.msra.mxu0 %v702
  %836 = vmatprep.subr.mxu0 0.0
  %837 = vmatpush1.msra.mxu0 %v703
  %838 = vmatprep.subr.mxu0 0.0
  %839 = vmatpush1.msra.mxu0 %v704
  %840 = vmatprep.subr.mxu0 0.0
  %841 = vmatpush1.msra.mxu0 %v705
  %842 = vmatprep.subr.mxu0 0.0
  %843 = vmatpush1.msra.mxu0 %v706
  %844 = vmatprep.subr.mxu0 0.0
  %845 = vmatpush1.msra.mxu0 %v707
  %846 = vmatprep.subr.mxu0 0.0
  %847 = vmatpush1.msra.mxu0 %v708
  %848 = vmatprep.subr.mxu0 0.0
  %849 = vmatpush1.msra.mxu0 %v709
  %850 = vmatprep.subr.mxu0 0.0
  %851 = vmatpush1.msra.mxu0 %v710
  %852 = vmatprep.subr.mxu0 0.0
  %853 = vmatpush1.msra.mxu0 %v711
  %854 = vmatprep.subr.mxu0 0.0
  %855 = vmatpush1.msra.mxu0 %v712
  %856 = vmatprep.subr.mxu0 0.0
  %857 = vmatpush1.msra.mxu0 0.0
  %858 = vmatprep.subr.mxu0 0.0
  %859 = vmatpush1.msra.mxu0 0.0
  %860 = vmatprep.subr.mxu0 0.0
  %861 = vmatpush1.msra.mxu0 0.0
  %862 = vmatprep.subr.mxu0 0.0
  %863 = vmatpush1.msra.mxu0 0.0
  %864 = vmatprep.subr.mxu0 0.0
  %865 = vmatpush1.msra.mxu0 0.0
  %866 = vmatprep.subr.mxu0 0.0
  %867 = vmatpush1.msra.mxu0 0.0
  %868 = vmatprep.subr.mxu0 0.0
  %869 = vmatpush1.msra.mxu0 0.0
  %870 = vmatprep.subr.mxu0 0.0
  %871 = vmatpush1.msra.mxu0 0.0
  %872 = vmatprep.subr.mxu0 0.0
  %873 = vmatpush1.msra.mxu0 0.0
  %874 = vmatprep.subr.mxu0 0.0
  %875 = vmatpush1.msra.mxu0 0.0
  %876 = vmatprep.subr.mxu0 0.0
  %877 = vmatpush1.msra.mxu0 0.0
  %878 = vmatprep.subr.mxu0 0.0
  %879 = vmatpush1.msra.mxu0 0.0
  %880 = vmatprep.subr.mxu0 0.0
  %881 = vmatpush1.msra.mxu0 0.0
  %882 = vmatprep.subr.mxu0 0.0
  %883 = vmatpush1.msra.mxu0 0.0
  %884 = vmatprep.subr.mxu0 0.0
  %885 = vmatpush1.msra.mxu0 0.0
  %886 = vmatprep.subr.mxu0 0.0
  %887 = vmatpush1.msra.mxu0 0.0
  %888 = vmatprep.mubr.f32.mxu0 0.0
  %889 = vmatmul.mubr.f32.gmra.mrb[0].mxu0 %v174
  %v890 = vpop.f32.mrb[0].mxu0
  %v891 = vadd.f32 %v796, %v890
  %v892 = vpop.f32.mrb[0].mxu0
  %893 = vmatprep.mubr.f32.mxu0 0.0
  %894 = vmatmul.mubr.f32.gmra.mrb[0].mxu0 %v176
  %v895 = vpop.f32.mrb[0].mxu0
  %v896 = vadd.f32 %v801, %v895
  %v897 = vpop.f32.mrb[0].mxu0
  %898 = vmatprep.mubr.f32.mxu0 0.0
  %899 = vmatmul.mubr.f32.gmra.mrb[0].mxu0 %v178
  %v900 = vpop.f32.mrb[0].mxu0
  %v901 = vadd.f32 %v806, %v900
  %v902 = vpop.f32.mrb[0].mxu0
  %903 = vmatprep.mubr.f32.mxu0 0.0
  %904 = vmatmul.mubr.f32.gmra.mrb[0].mxu0 %v180
  %v905 = vpop.f32.mrb[0].mxu0
  %v906 = vadd.f32 %v811, %v905
  %v907 = vpop.f32.mrb[0].mxu0
  %908 = vmatprep.mubr.f32.mxu0 0.0
  %909 = vmatmul.mubr.f32.gmra.mrb[0].mxu0 %v182
  %v910 = vpop.f32.mrb[0].mxu0
  %v911 = vadd.f32 %v816, %v910
  %v912 = vpop.f32.mrb[0].mxu0
  %913 = vmatprep.mubr.f32.mxu0 0.0
  %914 = vmatmul.mubr.f32.gmra.mrb[0].mxu0 %v184
  %v915 = vpop.f32.mrb[0].mxu0
  %v916 = vadd.f32 %v821, %v915
  %v917 = vpop.f32.mrb[0].mxu0
  %918 = vdwg.mxu0
  %v919 = vld [vmem:[%s5 + $0x1] sm:$0x1]
  %v920 = vlaneseq
  %v921 = vshrl.u32 %v920, 7
  %v922 = vsub.s32 0, %v921
  %v923 = vrot.slane %v919, %v922
  %v924 = vadd.f32 %v891, %v923
  %v925 = vadd.f32 %v896, %v923
  %v926 = vadd.f32 %v901, %v923
  %v927 = vadd.f32 %v906, %v923
  %v928 = vadd.f32 %v911, %v923
  %v929 = vadd.f32 %v916, %v923
  %v930 = vmax.f32 %v924, 0.0
  %v931 = vmax.f32 %v925, 0.0
  %v932 = vmax.f32 %v926, 0.0
  %v933 = vmax.f32 %v927, 0.0
  %v934 = vmax.f32 %v928, 0.0
  %v935 = vmax.f32 %v929, 0.0
  %936 = vst [vmem:[%s6] sm:$0xff] %v930
  %937 = vst [vmem:[%s6 + $0x8] sm:$0xff] %v931
  %938 = vst [vmem:[%s6 + $0x10] sm:$0xff] %v932
  %939 = vst [vmem:[%s6 + $0x18] sm:$0xff] %v933
  %940 = vst [vmem:[%s6 + $0x20] sm:$0xff] %v934
  %941 = vst [vmem:[%s6 + $0x28] sm:$0xff] %v935
  // Predicated region
  $region26: #{tcn_block_forward.1} parent=0 // pred_check
    _
  $region27: #{tcn_block_forward.1} parent=0 // pred_check_branch
    %943 = sbr.rel (0) target = $region29
  $region28: #{tcn_block_forward.1} parent=0 // pred_region
    _
  $region29: #{tcn_block_forward.1} parent=0 // pred_fallthru
    _
  // Predicated region
  $region30: #{tcn_block_forward.1} parent=0 // pred_check
    _
  $region31: #{tcn_block_forward.1} parent=0 // pred_check_branch
    %945 = sbr.rel (0) target = $region33
  $region32: #{tcn_block_forward.1} parent=0 // pred_region
    _
  $region33: #{tcn_block_forward.1} parent=0 // pred_fallthru
    _

</llo_original>
